<compile_context>
chip_gen: v5e
topology: v5e:2x2
jax: 0.10.0
libtpu: 0.0.40
codegen_flags: <defaults>
</compile_context>

<pallas_src>
import functools

import jax
import jax.numpy as jnp
from jax.experimental import pallas as pl
from jax.experimental.pallas import tpu as pltpu


def _pixelnorm_kernel(x_ref, o_ref, *, epsilon, inv_c):
    # x_ref / o_ref: (1, C, TILE_HW) block in VMEM; reduction is over axis=1 (C).
    xf = x_ref[...].astype(jnp.float32)                     # hoisted upcast
    ss = jnp.sum(xf * xf, axis=1, keepdims=True)            # (1, 1, TILE_HW), f32
    scale = jax.lax.rsqrt(ss * inv_c + epsilon)             # rsqrt -> EUP slot
    o_ref[...] = (xf * scale).astype(o_ref.dtype)


def _choose_tile_hw(hw, c, itemsize, n):
    """Pick a multiple-of-128 spatial tile sized by bytes (~2 MiB per block)."""
    cap_bytes = 2 << 20  # ~2 MiB input block: 4x (double-buffered in+out) fits
                         # comfortably under v5e's 16 MiB default scoped VMEM
                         # and v6e/v7x's 32 MiB scope.
    hw_padded = pl.cdiv(hw, 128) * 128
    bytes_per_lane_col = max(1, c * itemsize)
    tile = (cap_bytes // bytes_per_lane_col) // 128 * 128
    tile = max(128, min(tile, hw_padded))
    # TODO(synk): for extremely large C (block > scoped VMEM even at 128 lanes),
    # split C into an "arbitrary" reduction grid axis with a scratch accumulator.

    # v7x has 2 TensorCores: make sure the (parallel) grid has >= 2 programs.
    while n * pl.cdiv(hw, tile) < 2 and tile > 128:
        tile = max(128, (tile // 2) // 128 * 128)
    return tile


def pixel_norm(x, epsilon=1e-8):
    """PixelNorm: x / sqrt(mean(x**2, dim=1, keepdim=True) + eps). x is NCHW."""
    N, C, H, W = x.shape
    HW = H * W
    itemsize = jnp.dtype(x.dtype).itemsize
    x_flat = x.reshape(N, C, HW)  # metadata-only reshape; layout unchanged

    tile_hw = _choose_tile_hw(HW, C, itemsize, N)
    grid = (N, pl.cdiv(HW, tile_hw))

    kernel = functools.partial(
        _pixelnorm_kernel, epsilon=float(epsilon), inv_c=float(1.0 / C)
    )

    cost = pl.CostEstimate(
        flops=3 * N * C * HW,
        transcendentals=N * HW,
        bytes_accessed=2 * N * C * HW * itemsize,
    )

    out_flat = pl.pallas_call(
        kernel,
        out_shape=jax.ShapeDtypeStruct((N, C, HW), x.dtype),
        grid=grid,
        in_specs=[pl.BlockSpec((1, C, tile_hw), lambda n, t: (n, 0, t))],
        out_specs=pl.BlockSpec((1, C, tile_hw), lambda n, t: (n, 0, t)),
        compiler_params=pltpu.CompilerParams(
            dimension_semantics=("parallel", "parallel")
        ),
        cost_estimate=cost,
    )(x_flat)

    return out_flat.reshape(N, C, H, W)


if __name__ == "__main__":
    key = jax.random.PRNGKey(0)
    x = jax.random.normal(key, (2, 4, 16, 16), dtype=jnp.float32)

    out = pixel_norm(x, epsilon=1e-8)
    out = jax.block_until_ready(out)

    # reference check in plain JAX
    ref = x / jnp.sqrt(jnp.mean(x * x, axis=1, keepdims=True) + 1e-8)
    assert out.shape == x.shape and out.dtype == x.dtype
    assert jnp.allclose(out, ref, atol=1e-5, rtol=1e-5)

    print("KERNEL_OK")
</pallas_src>

<mosaic_0001>
module attributes {stable_mosaic.version = 11 : i64} {
  func.func @_pixelnorm_kernel(%arg0: i32, %arg1: i32, %arg2: memref<1x4x256xf32, #tpu.memory_space<vmem>>, %arg3: memref<1x4x256xf32, #tpu.memory_space<vmem>>) attributes {dimension_semantics = [#tpu.dimension_semantics<parallel>, #tpu.dimension_semantics<parallel>], iteration_bounds = array<i64: 2, 1>, scalar_prefetch = 0 : i64, scratch_operands = 0 : i64, tpu.core_type = #tpu.core_type<tc>, window_params = [{transform_indices = @transform_0, window_bounds = array<i64: 1, 4, 256>}, {transform_indices = @transform_1, window_bounds = array<i64: 1, 4, 256>}]} {
    %c0 = arith.constant 0 : index
    %c0_0 = arith.constant 0 : index
    %c0_1 = arith.constant 0 : index
    %0 = vector.load %arg2[%c0, %c0_0, %c0_1] : memref<1x4x256xf32, #tpu.memory_space<vmem>>, vector<1x4x256xf32>
    %1 = arith.mulf %0, %0 : vector<1x4x256xf32>
    %cst = arith.constant dense<0.000000e+00> : vector<1x256xf32>
    %2 = vector.multi_reduction <add>, %1, %cst [1] : vector<1x4x256xf32> to vector<1x256xf32>
    %3 = vector.shape_cast %2 : vector<1x256xf32> to vector<1x1x256xf32>
    %cst_2 = arith.constant 2.500000e-01 : f32
    %4 = vector.broadcast %cst_2 : f32 to vector<1x1x256xf32>
    %5 = arith.mulf %3, %4 : vector<1x1x256xf32>
    %cst_3 = arith.constant 9.99999993E-9 : f32
    %6 = vector.broadcast %cst_3 : f32 to vector<1x1x256xf32>
    %7 = arith.addf %5, %6 : vector<1x1x256xf32>
    %8 = math.rsqrt %7 : vector<1x1x256xf32>
    %9 = vector.broadcast %8 : vector<1x1x256xf32> to vector<1x4x256xf32>
    %10 = arith.mulf %0, %9 : vector<1x4x256xf32>
    %c0_4 = arith.constant 0 : index
    %c0_5 = arith.constant 0 : index
    %c0_6 = arith.constant 0 : index
    %11 = vector.load %arg3[%c0_4, %c0_5, %c0_6] : memref<1x4x256xf32, #tpu.memory_space<vmem>>, vector<1x4x256xf32>
    tpu.vector_store %arg3[%c0_4, %c0_5, %c0_6], %10 {strides = array<i32>} : memref<1x4x256xf32, #tpu.memory_space<vmem>>, vector<1x4x256xf32>,
    return
  }
  func.func @transform_0(%arg0: i32, %arg1: i32) -> (i32, i32, i32) {
    %c0_i32 = arith.constant 0 : i32
    %c0_i32_0 = arith.constant 0 : i32
    return %arg0, %c0_i32, %arg1 : i32, i32, i32
  }
  func.func @transform_1(%arg0: i32, %arg1: i32) -> (i32, i32, i32) {
    %c0_i32 = arith.constant 0 : i32
    %c0_i32_0 = arith.constant 0 : i32
    return %arg0, %c0_i32, %arg1 : i32, i32, i32
  }
}

</mosaic_0001>

<llo_original>
// kernel: tpu_custom_call.1
$region0: #{tpu_custom_call.1}
  #allocation0 [shape = 'u32[]', space=smem, size = 0x4, offset = 0x4, fixed_abs, tag = 'smem constant byte address 0x4 - core index']
  #allocation1 [shape = 'u32[72,128]{1,0:T(1,128)}', space=vmem, size = 0x9000, scoped, tag = 'internal scratch']
  %s0 = inlined_call_operand.hbm [shape: f32[2,4,256], index: 0, kind: input, shape index: {}]
  %s1 = inlined_call_operand.hbm [shape: f32[2,4,256], index: 1, kind: output, shape index: {}]
  %s2 = sld [smem:[#allocation0]]
  $region41: #{tpu_custom_call.1} parent=0
    _
  %s4 = ssub.s32 1, %s2
  %s5 = scalar_select 0, %s4, %s2
  $region1: #{tpu_custom_call.1} parent=0
    #allocation2 [shape = 'u8[8192]{0}', space=vmem, size = 0x2000, scoped, tag = 'input window, operand 0']
    #allocation3 [shape = 's32[2]{0}', space=sflag, size = 0x8, scoped, tag = 'scoped memory for tpu_custom_call.1']
    #allocation4 [shape = 's32[2]{0}', space=sflag, size = 0x8, scoped, tag = 'scoped memory for tpu_custom_call.1']
    #allocation5 [shape = 'u8[8192]{0}', space=vmem, size = 0x2000, scoped, tag = 'output window, operand 0']
    %6 = vsyncpa [#allocation3], 0
    %s7 = scalar_lea.sflag [#allocation3], 1
    %8 = vsyncpa %s7, 0
    %9 = vsyncpa [#allocation4], 0
    %s10 = scalar_lea.sflag [#allocation4], 1
    %11 = vsyncpa %s10, 0
    loop: start=0, step=1, limit=4
    $region2: #{tpu_custom_call.1} parent=1 // loop_pre_header
      _
    $region3: #{tpu_custom_call.1} parent=1 // loop_header
      %s13 = sphi 0, %s17
      %p14 = scmp.ge.s32.totalorder %s13, 4
      %s20 = sphi 0, %s32
      %s21 = sphi 0, %s28
      %s22 = sphi 0, %s20
      %s23 = sphi 0, %s21
      %s24 = sphi 0, %s22
      %s25 = sphi 0, %s23
      %s37 = sphi 0, %s39
      %s40 = sphi 0, %s37
      %s41 = sphi 0, %s40
      %s57 = sphi 0, %s41
      %s65 = sphi 0, %s67
      %s68 = sphi 0, %s65
      %s69 = sphi 0, %s68
      %s85 = sphi 0, %s69
    $region4: #{tpu_custom_call.1} parent=1 // loop_header_branch
      %16 = sbr.rel (%p14) target = $region8
    $region5: #{tpu_custom_call.1} parent=1 // loop_body
      %s18 = ssub.s32 %s13, 1
      %s19 = ssub.s32 %s13, 2
      %s26 = sadd.s32 1, %s21
      %p27 = scmp.ge.s32.totalorder %s26, 1
      %s28 = scalar_select %p27, 0, %s26
      %s29 = sadd.s32 1, %s20
      %s30 = scalar_select %p27, %s29, %s20
      %p31 = scmp.ge.s32.totalorder %s30, 2
      %s32 = scalar_select %p31, 0, %s30
      %s33 = ssub.s32 %s20, %s32
      %s34 = ssub.s32 %s21, %s28
      %s35 = sor.u32 %s33, %s34
      %p36 = scmp.eq.s32.totalorder %s35, 0
      %s38 = sadd.s32 %s37, 1
      %s39 = scalar_select %p36, %s37, %s38
      %p42 = pneg %p36
      %p43 = scmp.eq.s32.totalorder %s13, 1
      %p44 = por %p42, %p43
      %p45 = scmp.ne.s32.totalorder %s37, %s40
      %p46 = scmp.eq.s32.totalorder %s13, 0
      %p47 = por %p45, %p46
      %p48 = scmp.ne.s32.totalorder %s37, %s40
      %p49 = scmp.eq.s32.totalorder %s18, 1
      %p50 = por %p48, %p49
      %p51 = scmp.ne.s32.totalorder %s40, %s41
      %p52 = scmp.eq.s32.totalorder %s18, 0
      %p53 = por %p51, %p52
      %p54 = scmp.ne.s32.totalorder %s40, %s41
      %p55 = scmp.eq.s32.totalorder %s19, 1
      %p56 = por %p54, %p55
      %p58 = scmp.ne.s32.totalorder %s41, %s57
      %p59 = scmp.eq.s32.totalorder %s19, 0
      %p60 = por %p58, %p59
      %s61 = ssub.s32 %s20, %s32
      %s62 = ssub.s32 %s21, %s28
      %s63 = sor.u32 %s61, %s62
      %p64 = scmp.eq.s32.totalorder %s63, 0
      %s66 = sadd.s32 %s65, 1
      %s67 = scalar_select %p64, %s65, %s66
      %p70 = pneg %p64
      %p71 = scmp.eq.s32.totalorder %s13, 1
      %p72 = por %p70, %p71
      %p73 = scmp.ne.s32.totalorder %s65, %s68
      %p74 = scmp.eq.s32.totalorder %s13, 0
      %p75 = por %p73, %p74
      %p76 = scmp.ne.s32.totalorder %s65, %s68
      %p77 = scmp.eq.s32.totalorder %s18, 1
      %p78 = por %p76, %p77
      %p79 = scmp.ne.s32.totalorder %s68, %s69
      %p80 = scmp.eq.s32.totalorder %s18, 0
      %p81 = por %p79, %p80
      %p82 = scmp.ne.s32.totalorder %s68, %s69
      %p83 = scmp.eq.s32.totalorder %s19, 1
      %p84 = por %p82, %p83
      %p86 = scmp.ne.s32.totalorder %s69, %s85
      %p87 = scmp.eq.s32.totalorder %s19, 0
      %p88 = por %p86, %p87
      %p89 = scmp.le.s32.totalorder 1, %s13
      %p90 = scmp.lt.s32.totalorder %s13, 3
      %p91 = pnand %p89, %p90
      %p92 = pneg %p91
      // Predicated region
      $region9: #{tpu_custom_call.1} parent=5 // pred_check
        _
      $region10: #{tpu_custom_call.1} parent=5 // pred_check_branch
        %94 = sbr.rel (%p91) target = $region12
      $region11: #{tpu_custom_call.1} parent=5 // pred_region
        %s95 = ssub.s32 %s13, 1
      $region12: #{tpu_custom_call.1} parent=5 // pred_fallthru
        _
      %p96 = scmp.lt.s32.totalorder %s13, 2
      // Predicated region
      $region13: #{tpu_custom_call.1} parent=5 // pred_check
        %p97 = pneg %p96
      $region14: #{tpu_custom_call.1} parent=5 // pred_check_branch
        %99 = sbr.rel (%p97) target = $region16
      $region15: #{tpu_custom_call.1} parent=5 // pred_region
        // Predicated region
        $region17: #{tpu_custom_call.1} parent=15 // pred_check
          %p100 = pneg %p47
        $region18: #{tpu_custom_call.1} parent=15 // pred_check_branch
          %102 = sbr.rel (%p100) target = $region20
        $region19: #{tpu_custom_call.1} parent=15 // pred_region
          %s103 = sand.u32 %s37, 1
          %s104 = scalar_lea.sflag [#allocation3], %s103
          %s105 = sand.u32 %s37, 1
          %s106 = smul.addr %s105, 8
          %s107 = scalar_lea.vmem [#allocation2], %s106
          %s108 = smul.u32 2, %s21
          %110 = vsyncadd %s104, 0
          %s111 = smul.addr %s20, 2
          %s112 = sadd.s32 %s108, %s111
          %s113 = smul.addr %s112, 4
          %s114 = scalar_lea.hbm %s0, %s113
          %s116 = sshll.u32 %s114, 4
          %s117 = int_to_ptr.hbm [resolvable:$true] %s116
          %s118 = sshll.u32 %s107, 4
          %s119 = int_to_ptr.vmem [resolvable:$true] %s118
          %121 = dma.hbm_to_vmem [thread:$0]  %s117, 128, %s119, %s104
        $region20: #{tpu_custom_call.1} parent=15 // pred_fallthru
          _
      $region16: #{tpu_custom_call.1} parent=5 // pred_fallthru
        _
      %p122 = scmp.le.s32.totalorder 1, %s13
      %p123 = scmp.lt.s32.totalorder %s13, 3
      %p124 = pnand %p122, %p123
      %p125 = pneg %p124
      // Predicated region
      $region21: #{tpu_custom_call.1} parent=5 // pred_check
        _
      $region22: #{tpu_custom_call.1} parent=5 // pred_check_branch
        %127 = sbr.rel (%p124) target = $region24
      $region23: #{tpu_custom_call.1} parent=5 // pred_region
        %s128 = ssub.s32 %s13, 1
        %s129 = sand.u32 %s40, 1
        %s130 = scalar_lea.sflag [#allocation3], %s129
        %s131 = sand.u32 %s40, 1
        %s132 = smul.addr %s131, 8
        %s133 = scalar_lea.vmem [#allocation2], %s132
        // Predicated region
        $region25: #{tpu_custom_call.1} parent=23 // pred_check
          %p134 = pneg %p53
        $region26: #{tpu_custom_call.1} parent=23 // pred_check_branch
          %136 = sbr.rel (%p134) target = $region28
        $region27: #{tpu_custom_call.1} parent=23 // pred_region
          %138 = dma.done %s130, 128
        $region28: #{tpu_custom_call.1} parent=23 // pred_fallthru
          _
        %s139 = sand.u32 %s40, 1
        %s140 = scalar_lea.sflag [#allocation3], %s139
        %s141 = sand.u32 %s40, 1
        %s142 = smul.addr %s141, 8
        %s143 = scalar_lea.vmem [#allocation2], %s142
        %p144 = pneg %p53
        %p145 = pneg %p50
        %p146 = pneg %p81
        %p147 = pneg %p78
        %s148 = sand.u32 %s68, 1
        %s149 = scalar_lea.sflag [#allocation4], %s148
        %s150 = sand.u32 %s68, 1
        %s151 = smul.addr %s150, 8
        %s152 = scalar_lea.vmem [#allocation5], %s151
        %s153 = smul.u32 2, %s23
        %s154 = smul.u32 2, %s23
        %v155 = vld [vmem:[%s133] sm:$0xff]
        %v156 = vmul.f32 %v155, %v155
        %158 = vst [vmem:[#allocation1] ss:$2 sm:$0xff] %v156
        %v159 = vld.sshfl [vmem:[#allocation1] sm:$0xff pattern:$0x75316420]
        %v160 = vld.sshfl [vmem:[#allocation1 + $0x8] sm:$0xff pattern:$0x75316420]
        %vm163 = vcmask 1043456
        %v164 = vsel %vm163, %v159, 0.0
        %v165 = vrot.slane %v164, 4
        %v166 = vadd.f32 %v164, %v165
        %v167 = vrot.slane %v166, 2
        %v168 = vadd.f32 %v166, %v167
        %v169 = vrot.slane %v168, 1
        %v170 = vadd.f32 %v168, %v169
        %v171 = vsel %vm163, %v160, 0.0
        %v172 = vrot.slane %v171, 4
        %v173 = vadd.f32 %v171, %v172
        %v174 = vrot.slane %v173, 2
        %v175 = vadd.f32 %v173, %v174
        %v176 = vrot.slane %v175, 1
        %v177 = vadd.f32 %v175, %v176
        %v178 = vmul.f32 %v170, 0.25
        %v179 = vmul.f32 %v177, 0.25
        %v180 = vadd.f32 %v178, 1e-08
        %v181 = vadd.f32 %v179, 1e-08
        %v182 = vrsqrt.pop %v180
        %v183 = vmul.f32 %v182, %v180
        %v184 = vmul.f32 %v183, %v182
        %v185 = vmul.f32 0.5, %v184
        %v186 = vsub.f32 1.5, %v185
        %v187 = vmul.f32 %v182, %v186
        %vm188 = vweird.f32 %v180
        %vm189 = vweird.f32 %v182
        %vm190 = vmor %vm188, %vm189
        %v191 = vsel %vm190, %v182, %v187
        %v192 = vrsqrt.pop %v181
        %v193 = vmul.f32 %v192, %v181
        %v194 = vmul.f32 %v193, %v192
        %v195 = vmul.f32 0.5, %v194
        %v196 = vsub.f32 1.5, %v195
        %v197 = vmul.f32 %v192, %v196
        %vm198 = vweird.f32 %v181
        %vm199 = vweird.f32 %v192
        %vm200 = vmor %vm198, %vm199
        %v201 = vsel %vm200, %v192, %v197
        %v204 = vrot.slane %v201, 4
        %v205 = vsel %vm163, %v191, %v204
        %v207 = vmul.f32 %v155, %v205
        %208 = vst [vmem:[%s152] sm:$0xff] %v207
        %s209 = sand.u32 %s68, 1
        %s210 = scalar_lea.sflag [#allocation4], %s209
        %s211 = sand.u32 %s68, 1
        %s212 = smul.addr %s211, 8
        %s213 = scalar_lea.vmem [#allocation5], %s212
        // Predicated region
        $region29: #{tpu_custom_call.1} parent=23 // pred_check
          %p214 = pneg %p78
        $region30: #{tpu_custom_call.1} parent=23 // pred_check_branch
          %216 = sbr.rel (%p214) target = $region32
        $region31: #{tpu_custom_call.1} parent=23 // pred_region
          %s217 = smul.u32 2, %s23
          %219 = vsyncadd %s210, 0
          %s220 = smul.addr %s22, 2
          %s221 = sadd.s32 %s217, %s220
          %s222 = smul.addr %s221, 4
          %s223 = scalar_lea.hbm %s1, %s222
          %s225 = sshll.u32 %s213, 4
          %s226 = int_to_ptr.vmem [resolvable:$true] %s225
          %s227 = sshll.u32 %s223, 4
          %s228 = int_to_ptr.hbm [resolvable:$true] %s227
          %230 = dma.vmem_to_hbm [thread:$0]  %s226, 128, %s228, %s210
        $region32: #{tpu_custom_call.1} parent=23 // pred_fallthru
          _
      $region24: #{tpu_custom_call.1} parent=5 // pred_fallthru
        _
      %p231 = scmp.le.s32.totalorder 2, %s13
      // Predicated region
      $region33: #{tpu_custom_call.1} parent=5 // pred_check
        %p232 = pneg %p231
      $region34: #{tpu_custom_call.1} parent=5 // pred_check_branch
        %234 = sbr.rel (%p232) target = $region36
      $region35: #{tpu_custom_call.1} parent=5 // pred_region
        %s235 = ssub.s32 %s13, 2
        // Predicated region
        $region37: #{tpu_custom_call.1} parent=35 // pred_check
          %p236 = pneg %p84
        $region38: #{tpu_custom_call.1} parent=35 // pred_check_branch
          %238 = sbr.rel (%p236) target = $region40
        $region39: #{tpu_custom_call.1} parent=35 // pred_region
          %s239 = sand.u32 %s69, 1
          %s240 = scalar_lea.sflag [#allocation4], %s239
          %s241 = sand.u32 %s69, 1
          %s242 = smul.addr %s241, 8
          %s243 = scalar_lea.vmem [#allocation5], %s242
          %245 = dma.done %s240, 128
        $region40: #{tpu_custom_call.1} parent=35 // pred_fallthru
          _
      $region36: #{tpu_custom_call.1} parent=5 // pred_fallthru
        _
    $region6: #{tpu_custom_call.1} parent=1 // loop_footer
      %s17 = sadd.s32 1, %s13
    $region7: #{tpu_custom_call.1} parent=1 // loop_footer_branch
      %12 = sbr.rel target = $region3
    $region8: #{tpu_custom_call.1} parent=1 // loop_exit
      _
    %246 = vsyncpa [#allocation3], 1
    %s247 = scalar_lea.sflag [#allocation3], 1
    %248 = vsyncpa %s247, 1
    %249 = vsyncpa [#allocation4], 1
    %s250 = scalar_lea.sflag [#allocation4], 1
    %251 = vsyncpa %s250, 1

</llo_original>
